<compile_context>
chip_gen: v7x
topology: tpu7x:2x2x1
jax: 0.10.0
libtpu: 0.0.40
codegen_flags: <defaults>
</compile_context>

<pallas_src>
import jax
import jax.numpy as jnp
from jax.experimental import pallas as pl
from jax.experimental.pallas import tpu as pltpu

K = 4          # sequence length considered for prediction
H1 = 256
H2 = 128
OUT = 1


def _round_up(x, m):
    return ((x + m - 1) // m) * m


def _fcnn_kernel(x_ref, w1_ref, b1_ref, w2_ref, b2_ref, w3_ref, b3_ref, o_ref):
    x = x_ref[...]                                            # (TM, K) f32

    # fc1 on the VPU: h1 = b1 + sum_i x[:, i] * w1[i, :]
    # (contraction dim K=4 is too small for the MXU). Two independent FMA
    # chains shorten the VALU dependency chain; b1 folded into chain A.
    h1a = b1_ref[...] + x[:, 0:1] * w1_ref[0:1, :]            # (TM, H1)
    h1b = x[:, 1:2] * w1_ref[1:2, :]
    for i in range(2, K, 2):                                  # unrolled at trace time
        h1a = h1a + x[:, i:i + 1] * w1_ref[i:i + 1, :]
        h1b = h1b + x[:, i + 1:i + 2] * w1_ref[i + 1:i + 2, :]
    h1 = h1a + h1b                                            # (TM, H1) f32
    # dropout1: identity in eval mode

    # fc2 on the MXU: (TM, 256) x (256, 128), bf16 operands, f32 accumulate.
    h2 = jnp.dot(h1.astype(jnp.bfloat16), w2_ref[...],
                 preferred_element_type=jnp.float32) + b2_ref[...]   # (TM, H2)
    # dropout2: identity in eval mode

    # fc3 on the VPU + lane (XLU) reduction; w3 is a lane-dense (1, H2) row.
    y = jnp.sum(h2 * w3_ref[...], axis=-1, keepdims=True) + b3_ref[...]  # (TM, 1)
    o_ref[...] = y


def init_params(key):
    """Deterministic parameter init matching nn.Linear fan-in bounds.

    w1, w2 stored as (in, out) so the kernel computes x @ W; w3 stored as a
    lane-dense (1, 128) row (= nn.Linear's (out, in) layout); b3 as (1, 1).
    """
    ks = jax.random.split(key, 6)

    def uni(k, shape, fan_in):
        bound = 1.0 / jnp.sqrt(fan_in)
        return jax.random.uniform(k, shape, jnp.float32, -bound, bound)

    w1 = uni(ks[0], (K, H1), K)
    b1 = uni(ks[1], (1, H1), K)
    w2 = uni(ks[2], (H1, H2), H1)
    b2 = uni(ks[3], (1, H2), H1)
    w3 = uni(ks[4], (1, H2), H2)
    b3 = uni(ks[5], (1, 1), H2)
    return (w1, b1, w2, b2, w3, b3)


def fcnn_forward_batched(windows, params, *, tile_m=None):
    """Evaluate the FCNN on M sliding-window rows in one pallas_call.

    windows: (M, K) float32.  Returns (M,) float32 predictions.
    """
    windows = jnp.asarray(windows, jnp.float32)
    if windows.ndim != 2 or windows.shape[1] != K:
        raise ValueError(f"windows must be (M, {K}), got {windows.shape}")
    m = windows.shape[0]

    if tile_m is None:
        # 256 fills the v6e/v7x 256x256 MXU; small M falls back to one 8-row tile.
        tile_m = 256 if m >= 256 else _round_up(m, 8)
    m_pad = _round_up(m, tile_m)
    if m_pad != m:
        windows = jnp.pad(windows, ((0, m_pad - m), (0, 0)))

    w1, b1, w2, b2, w3, b3 = params
    w2_bf16 = w2.astype(jnp.bfloat16)   # MXU-native dtype; halves weight DMA

    grid = (m_pad // tile_m,)

    def const(shape):
        # Weight blocks: same block index every step -> DMA'd once, VMEM-resident.
        return pl.BlockSpec(shape, lambda i: (0, 0))

    out = pl.pallas_call(
        _fcnn_kernel,
        out_shape=jax.ShapeDtypeStruct((m_pad, 1), jnp.float32),
        grid=grid,
        in_specs=[
            pl.BlockSpec((tile_m, K), lambda i: (i, 0)),   # windows, tiled over M
            const((K, H1)),      # w1
            const((1, H1)),      # b1
            const((H1, H2)),     # w2 (bf16)
            const((1, H2)),      # b2
            const((1, H2)),      # w3 row
            const((1, 1)),       # b3
        ],
        out_specs=pl.BlockSpec((tile_m, 1), lambda i: (i, 0)),
        compiler_params=pltpu.CompilerParams(
            dimension_semantics=("parallel",)),   # shard M across v7x's 2 TCs
    )(windows, w1, b1, w2_bf16, b2, w3, b3)

    return out[:m, 0]


def fcnn_forward(prev_values, params):
    """Module-faithful forward: 1-D prev_values -> shape-(1,) prediction."""
    prev_values = jnp.asarray(prev_values, jnp.float32)
    if prev_values.shape[0] < K:
        raise ValueError(
            f"Size of input be at least `k`: {prev_values.shape[0]} != {K}")
    window = prev_values[:K].reshape(1, K)
    return fcnn_forward_batched(window, params).reshape(OUT)


def _reference_batched(windows, params):
    """Pure-JAX f32 reference of the PyTorch forward (eval mode)."""
    w1, b1, w2, b2, w3, b3 = params
    h1 = windows.astype(jnp.float32) @ w1 + b1
    h2 = h1 @ w2 + b2
    return (h2 @ w3.T + b3)[:, 0]


if __name__ == "__main__":
    key = jax.random.PRNGKey(0)
    pkey, xkey = jax.random.split(key)
    params = init_params(pkey)

    # --- module-faithful single prediction: sequence length 8 >= k=4 ---
    prev_values = jax.random.normal(xkey, (8,), jnp.float32)
    y1 = jax.block_until_ready(fcnn_forward(prev_values, params))
    y1_ref = _reference_batched(prev_values[:K].reshape(1, K), params)
    assert y1.shape == (OUT,)
    assert jnp.allclose(y1, y1_ref, atol=2e-2, rtol=2e-2), (y1, y1_ref)

    # --- batched path: 256 sliding windows from one small sequence, grid=(2,) ---
    seq = jax.random.normal(jax.random.fold_in(xkey, 1), (256 + K - 1,), jnp.float32)
    idx = jnp.arange(256)[:, None] + jnp.arange(K)[None, :]
    windows = seq[idx]                                        # (256, 4)
    yb = jax.block_until_ready(fcnn_forward_batched(windows, params, tile_m=128))
    yb_ref = _reference_batched(windows, params)
    assert yb.shape == (256,)
    # bf16 fc2 operands (f32 accumulate) -> small rounding vs the f32 reference.
    assert jnp.allclose(yb, yb_ref, atol=2e-2, rtol=2e-2), (
        float(jnp.max(jnp.abs(yb - yb_ref))))

    print("KERNEL_OK")
</pallas_src>

<mosaic_0001>
module attributes {stable_mosaic.version = 11 : i64} {
  func.func @_fcnn_kernel(%arg0: i32, %arg1: memref<8x4xf32, #tpu.memory_space<vmem>>, %arg2: memref<4x256xf32, #tpu.memory_space<vmem>>, %arg3: memref<1x256xf32, #tpu.memory_space<vmem>>, %arg4: memref<256x128xbf16, #tpu.memory_space<vmem>>, %arg5: memref<1x128xf32, #tpu.memory_space<vmem>>, %arg6: memref<1x128xf32, #tpu.memory_space<vmem>>, %arg7: memref<1x1xf32, #tpu.memory_space<vmem>>, %arg8: memref<8x1xf32, #tpu.memory_space<vmem>>) attributes {dimension_semantics = [#tpu.dimension_semantics<parallel>], iteration_bounds = array<i64: 1>, scalar_prefetch = 0 : i64, scratch_operands = 0 : i64, tpu.core_type = #tpu.core_type<tc>, window_params = [{transform_indices = @transform_0, window_bounds = array<i64: 8, 4>}, {pipeline_mode = #tpu.pipeline_mode<synchronous>, transform_indices = @transform_1, window_bounds = array<i64: 4, 256>}, {pipeline_mode = #tpu.pipeline_mode<synchronous>, transform_indices = @transform_2, window_bounds = array<i64: 1, 256>}, {pipeline_mode = #tpu.pipeline_mode<synchronous>, transform_indices = @transform_3, window_bounds = array<i64: 256, 128>}, {pipeline_mode = #tpu.pipeline_mode<synchronous>, transform_indices = @transform_4, window_bounds = array<i64: 1, 128>}, {pipeline_mode = #tpu.pipeline_mode<synchronous>, transform_indices = @transform_5, window_bounds = array<i64: 1, 128>}, {pipeline_mode = #tpu.pipeline_mode<synchronous>, transform_indices = @transform_6, window_bounds = array<i64: 1, 1>}, {transform_indices = @transform_7, window_bounds = array<i64: 8, 1>}]} {
    %c0 = arith.constant 0 : index
    %c0_0 = arith.constant 0 : index
    %0 = vector.load %arg1[%c0, %c0_0] : memref<8x4xf32, #tpu.memory_space<vmem>>, vector<8x4xf32>
    %c0_1 = arith.constant 0 : index
    %c0_2 = arith.constant 0 : index
    %1 = vector.load %arg3[%c0_1, %c0_2] : memref<1x256xf32, #tpu.memory_space<vmem>>, vector<1x256xf32>
    %2 = vector.extract_strided_slice %0 {offsets = [0, 0], sizes = [8, 1], strides = [1, 1]} : vector<8x4xf32> to vector<8x1xf32>
    %c0_3 = arith.constant 0 : index
    %c0_4 = arith.constant 0 : index
    %3 = vector.load %arg2[%c0_3, %c0_4] : memref<4x256xf32, #tpu.memory_space<vmem>>, vector<1x256xf32>
    %4 = vector.broadcast %2 : vector<8x1xf32> to vector<8x256xf32>
    %5 = vector.broadcast %3 : vector<1x256xf32> to vector<8x256xf32>
    %6 = arith.mulf %4, %5 : vector<8x256xf32>
    %7 = vector.broadcast %1 : vector<1x256xf32> to vector<8x256xf32>
    %8 = arith.addf %7, %6 : vector<8x256xf32>
    %9 = vector.extract_strided_slice %0 {offsets = [0, 1], sizes = [8, 1], strides = [1, 1]} : vector<8x4xf32> to vector<8x1xf32>
    %c1 = arith.constant 1 : index
    %c0_5 = arith.constant 0 : index
    %10 = vector.load %arg2[%c1, %c0_5] : memref<4x256xf32, #tpu.memory_space<vmem>>, vector<1x256xf32>
    %11 = vector.broadcast %9 : vector<8x1xf32> to vector<8x256xf32>
    %12 = vector.broadcast %10 : vector<1x256xf32> to vector<8x256xf32>
    %13 = arith.mulf %11, %12 : vector<8x256xf32>
    %14 = vector.extract_strided_slice %0 {offsets = [0, 2], sizes = [8, 1], strides = [1, 1]} : vector<8x4xf32> to vector<8x1xf32>
    %c2 = arith.constant 2 : index
    %c0_6 = arith.constant 0 : index
    %15 = vector.load %arg2[%c2, %c0_6] : memref<4x256xf32, #tpu.memory_space<vmem>>, vector<1x256xf32>
    %16 = vector.broadcast %14 : vector<8x1xf32> to vector<8x256xf32>
    %17 = vector.broadcast %15 : vector<1x256xf32> to vector<8x256xf32>
    %18 = arith.mulf %16, %17 : vector<8x256xf32>
    %19 = arith.addf %8, %18 : vector<8x256xf32>
    %20 = vector.extract_strided_slice %0 {offsets = [0, 3], sizes = [8, 1], strides = [1, 1]} : vector<8x4xf32> to vector<8x1xf32>
    %c3 = arith.constant 3 : index
    %c0_7 = arith.constant 0 : index
    %21 = vector.load %arg2[%c3, %c0_7] : memref<4x256xf32, #tpu.memory_space<vmem>>, vector<1x256xf32>
    %22 = vector.broadcast %20 : vector<8x1xf32> to vector<8x256xf32>
    %23 = vector.broadcast %21 : vector<1x256xf32> to vector<8x256xf32>
    %24 = arith.mulf %22, %23 : vector<8x256xf32>
    %25 = arith.addf %13, %24 : vector<8x256xf32>
    %26 = arith.addf %19, %25 : vector<8x256xf32>
    %27 = arith.truncf %26 : vector<8x256xf32> to vector<8x256xbf16>
    %c0_8 = arith.constant 0 : index
    %c0_9 = arith.constant 0 : index
    %28 = vector.load %arg4[%c0_8, %c0_9] : memref<256x128xbf16, #tpu.memory_space<vmem>>, vector<256x128xbf16>
    %cst = arith.constant dense<0.000000e+00> : vector<8x128xf32>
    %29 = tpu.matmul %27, %28, %cst {dimension_numbers = #tpu.dot_dimension_numbers<[1], [0], [0], [1], [0, 0, 1, 1], [], []>} : vector<8x256xbf16>, vector<256x128xbf16>, vector<8x128xf32> -> vector<8x128xf32>
    %c0_10 = arith.constant 0 : index
    %c0_11 = arith.constant 0 : index
    %30 = vector.load %arg5[%c0_10, %c0_11] : memref<1x128xf32, #tpu.memory_space<vmem>>, vector<1x128xf32>
    %31 = vector.broadcast %30 : vector<1x128xf32> to vector<8x128xf32>
    %32 = arith.addf %29, %31 : vector<8x128xf32>
    %c0_12 = arith.constant 0 : index
    %c0_13 = arith.constant 0 : index
    %33 = vector.load %arg6[%c0_12, %c0_13] : memref<1x128xf32, #tpu.memory_space<vmem>>, vector<1x128xf32>
    %34 = vector.broadcast %33 : vector<1x128xf32> to vector<8x128xf32>
    %35 = arith.mulf %32, %34 : vector<8x128xf32>
    %cst_14 = arith.constant dense<0.000000e+00> : vector<8xf32>
    %36 = vector.multi_reduction <add>, %35, %cst_14 [1] : vector<8x128xf32> to vector<8xf32>
    %37 = vector.shape_cast %36 : vector<8xf32> to vector<8x1xf32>
    %c0_15 = arith.constant 0 : index
    %c0_16 = arith.constant 0 : index
    %38 = vector.load %arg7[%c0_15, %c0_16] : memref<1x1xf32, #tpu.memory_space<vmem>>, vector<1x1xf32>
    %39 = vector.broadcast %38 : vector<1x1xf32> to vector<8x1xf32>
    %40 = arith.addf %37, %39 : vector<8x1xf32>
    %c0_17 = arith.constant 0 : index
    %c0_18 = arith.constant 0 : index
    %41 = vector.load %arg8[%c0_17, %c0_18] : memref<8x1xf32, #tpu.memory_space<vmem>>, vector<8x1xf32>
    tpu.vector_store %arg8[%c0_17, %c0_18], %40 {strides = array<i32>} : memref<8x1xf32, #tpu.memory_space<vmem>>, vector<8x1xf32>,
    return
  }
  func.func @transform_0(%arg0: i32) -> (i32, i32) {
    %c0_i32 = arith.constant 0 : i32
    %c0_i32_0 = arith.constant 0 : i32
    return %arg0, %c0_i32 : i32, i32
  }
  func.func @transform_1(%arg0: i32) -> (i32, i32) {
    %c0_i32 = arith.constant 0 : i32
    %c0_i32_0 = arith.constant 0 : i32
    %c0_i32_1 = arith.constant 0 : i32
    return %c0_i32, %c0_i32_0 : i32, i32
  }
  func.func @transform_2(%arg0: i32) -> (i32, i32) {
    %c0_i32 = arith.constant 0 : i32
    %c0_i32_0 = arith.constant 0 : i32
    %c0_i32_1 = arith.constant 0 : i32
    return %c0_i32, %c0_i32_0 : i32, i32
  }
  func.func @transform_3(%arg0: i32) -> (i32, i32) {
    %c0_i32 = arith.constant 0 : i32
    %c0_i32_0 = arith.constant 0 : i32
    %c0_i32_1 = arith.constant 0 : i32
    return %c0_i32, %c0_i32_0 : i32, i32
  }
  func.func @transform_4(%arg0: i32) -> (i32, i32) {
    %c0_i32 = arith.constant 0 : i32
    %c0_i32_0 = arith.constant 0 : i32
    %c0_i32_1 = arith.constant 0 : i32
    return %c0_i32, %c0_i32_0 : i32, i32
  }
  func.func @transform_5(%arg0: i32) -> (i32, i32) {
    %c0_i32 = arith.constant 0 : i32
    %c0_i32_0 = arith.constant 0 : i32
    %c0_i32_1 = arith.constant 0 : i32
    return %c0_i32, %c0_i32_0 : i32, i32
  }
  func.func @transform_6(%arg0: i32) -> (i32, i32) {
    %c0_i32 = arith.constant 0 : i32
    %c0_i32_0 = arith.constant 0 : i32
    %c0_i32_1 = arith.constant 0 : i32
    return %c0_i32, %c0_i32_0 : i32, i32
  }
  func.func @transform_7(%arg0: i32) -> (i32, i32) {
    %c0_i32 = arith.constant 0 : i32
    %c0_i32_0 = arith.constant 0 : i32
    return %arg0, %c0_i32 : i32, i32
  }
}

</mosaic_0001>

<llo_original>
// kernel: tpu_custom_call.1
$region0: #{tpu_custom_call.1}
  #allocation0 [shape = 'u32[]', space=smem, size = 0x4, offset = 0x4, fixed_abs, tag = 'smem constant byte address 0x4 - core index']
  #allocation1 [shape = 'u32[144,128]{1,0:T(1,128)}', space=vmem, size = 0x12000, scoped, tag = 'internal scratch']
  #allocation2 [shape = 'f32[1,1]{1,0:T(1,128)S(1)}', space=vmem, size = 0x200, scoped, tag = 'scoped memory for tpu_custom_call.1']
  %s0 = inlined_call_operand.vmem [shape: f32[8,4], index: 0, kind: input, shape index: {}]
  %s1 = inlined_call_operand.vmem [shape: f32[4,256], index: 1, kind: input, shape index: {}]
  %s2 = inlined_call_operand.vmem [shape: f32[1,256], index: 2, kind: input, shape index: {}]
  %s3 = inlined_call_operand.hbm [shape: bf16[256,128], index: 3, kind: input, shape index: {}]
  %s4 = inlined_call_operand.vmem [shape: f32[1,128], index: 4, kind: input, shape index: {}]
  %s5 = inlined_call_operand.vmem [shape: f32[1,128], index: 5, kind: input, shape index: {}]
  %s6 = inlined_call_operand.<no memory space> [shape: f32[1,1], index: 6, kind: input, shape index: {}]
  %s7 = inlined_call_operand.vmem [shape: f32[8,1], index: 7, kind: output, shape index: {}]
  %s8 = sld [smem:[#allocation0]]
  $region42: #{tpu_custom_call.1} parent=0
    _
  %s10 = ssub.s32 1, %s8
  %s11 = scalar_select 0, %s10, %s8
  %v12 = vstv %s6
  %13 = vst [vmem:[#allocation2] sm:$0x1] %v12
  $region1: #{tpu_custom_call.1} parent=0
    #allocation3 [shape = 'u8[65536]{0}', space=vmem, size = 0x10000, scoped, tag = 'input window, operand 3, single buffered']
    #allocation4 [shape = 's32[1]{0}', space=sflag, size = 0x4, scoped, tag = 'scoped memory for tpu_custom_call.1']
    %14 = vsyncpa [#allocation4], 0
    // Predicated region
    $region2: #{tpu_custom_call.1} parent=1 // pred_check
      _
    $region3: #{tpu_custom_call.1} parent=1 // pred_check_branch
      %16 = sbr.rel (0) target = $region5
    $region4: #{tpu_custom_call.1} parent=1 // pred_region
      _
    $region5: #{tpu_custom_call.1} parent=1 // pred_fallthru
      _
    // Predicated region
    $region6: #{tpu_custom_call.1} parent=1 // pred_check
      _
    $region7: #{tpu_custom_call.1} parent=1 // pred_check_branch
      %18 = sbr.rel (0) target = $region9
    $region8: #{tpu_custom_call.1} parent=1 // pred_region
      _
    $region9: #{tpu_custom_call.1} parent=1 // pred_fallthru
      _
    // Predicated region
    $region10: #{tpu_custom_call.1} parent=1 // pred_check
      _
    $region11: #{tpu_custom_call.1} parent=1 // pred_check_branch
      %20 = sbr.rel (0) target = $region13
    $region12: #{tpu_custom_call.1} parent=1 // pred_region
      _
    $region13: #{tpu_custom_call.1} parent=1 // pred_fallthru
      _
    // Predicated region
    $region14: #{tpu_custom_call.1} parent=1 // pred_check
      _
    $region15: #{tpu_custom_call.1} parent=1 // pred_check_branch
      %22 = sbr.rel (0) target = $region17
    $region16: #{tpu_custom_call.1} parent=1 // pred_region
      %s24 = ssub.s32 2048, 2048
      %25 = vsyncadd [#allocation4], %s24
      %s26 = sshll.u32 [#allocation3], 4
      %s27 = int_to_ptr.vmem [resolvable:$true] %s26
      %32 = dma.hbm_to_vmem [thread:$0]  %s3, 2048, %s27, [#allocation4], 64, 64, 4
    $region17: #{tpu_custom_call.1} parent=1 // pred_fallthru
      _
    // Predicated region
    $region18: #{tpu_custom_call.1} parent=1 // pred_check
      _
    $region19: #{tpu_custom_call.1} parent=1 // pred_check_branch
      %34 = sbr.rel (0) target = $region21
    $region20: #{tpu_custom_call.1} parent=1 // pred_region
      _
    $region21: #{tpu_custom_call.1} parent=1 // pred_fallthru
      _
    // Predicated region
    $region22: #{tpu_custom_call.1} parent=1 // pred_check
      _
    $region23: #{tpu_custom_call.1} parent=1 // pred_check_branch
      %36 = sbr.rel (0) target = $region25
    $region24: #{tpu_custom_call.1} parent=1 // pred_region
      _
    $region25: #{tpu_custom_call.1} parent=1 // pred_fallthru
      _
    // Predicated region
    $region26: #{tpu_custom_call.1} parent=1 // pred_check
      _
    $region27: #{tpu_custom_call.1} parent=1 // pred_check_branch
      %38 = sbr.rel (0) target = $region29
    $region28: #{tpu_custom_call.1} parent=1 // pred_region
      _
    $region29: #{tpu_custom_call.1} parent=1 // pred_fallthru
      _
    // Predicated region
    $region30: #{tpu_custom_call.1} parent=1 // pred_check
      _
    $region31: #{tpu_custom_call.1} parent=1 // pred_check_branch
      %40 = sbr.rel (0) target = $region33
    $region32: #{tpu_custom_call.1} parent=1 // pred_region
      %41 = dma.done [#allocation4], 2048
    $region33: #{tpu_custom_call.1} parent=1 // pred_fallthru
      _
    %v43 = vld [vmem:[%s0] sm:$0xff]
    %v44 = vld [vmem:[%s2] sm:$0x3]
    %v45 = vld [vmem:[%s1] ss:$4 sm:$0x3]
    %47 = vset.pattern.permute.xlu0 0
    %48 = vperm.xlu0 %47, %v43
    %v49 = vpop.permute.xlu0 %48
    %v52 = vlaneseq
    %v53 = vshrl.u32 %v52, 7
    %v54 = vsub.s32 0, %v53
    %v55 = vrot.slane %v45, %v54
    %v56 = vlaneseq
    %v57 = vshrl.u32 %v56, 7
    %v58 = vsub.s32 1, %v57
    %v59 = vrot.slane %v45, %v58
    %v62 = vmul.f32 %v49, %v55
    %v63 = vmul.f32 %v49, %v59
    %v65 = vlaneseq
    %v66 = vshrl.u32 %v65, 7
    %v67 = vsub.s32 0, %v66
    %v68 = vrot.slane %v44, %v67
    %v69 = vlaneseq
    %v70 = vshrl.u32 %v69, 7
    %v71 = vsub.s32 1, %v70
    %v72 = vrot.slane %v44, %v71
    %v75 = vadd.f32 %v68, %v62
    %v76 = vadd.f32 %v72, %v63
    %s77 = scalar_lea.vmem %s1, 1
    %v78 = vld [vmem:[%s77] ss:$4 sm:$0x3]
    %79 = vset.pattern.permute.xlu0 1
    %80 = vperm.xlu0 %79, %v43
    %v81 = vpop.permute.xlu0 %80
    %v84 = vlaneseq
    %v85 = vshrl.u32 %v84, 7
    %v86 = vsub.s32 0, %v85
    %v87 = vrot.slane %v78, %v86
    %v88 = vlaneseq
    %v89 = vshrl.u32 %v88, 7
    %v90 = vsub.s32 1, %v89
    %v91 = vrot.slane %v78, %v90
    %v94 = vmul.f32 %v81, %v87
    %v95 = vmul.f32 %v81, %v91
    %s96 = scalar_lea.vmem %s1, 2
    %v97 = vld [vmem:[%s96] ss:$4 sm:$0x3]
    %98 = vset.pattern.permute.xlu0 2
    %99 = vperm.xlu0 %98, %v43
    %v100 = vpop.permute.xlu0 %99
    %v103 = vlaneseq
    %v104 = vshrl.u32 %v103, 7
    %v105 = vsub.s32 0, %v104
    %v106 = vrot.slane %v97, %v105
    %v107 = vlaneseq
    %v108 = vshrl.u32 %v107, 7
    %v109 = vsub.s32 1, %v108
    %v110 = vrot.slane %v97, %v109
    %v113 = vmul.f32 %v100, %v106
    %v114 = vmul.f32 %v100, %v110
    %v115 = vadd.f32 %v75, %v113
    %v116 = vadd.f32 %v76, %v114
    %s117 = scalar_lea.vmem %s1, 3
    %v118 = vld [vmem:[%s117] ss:$4 sm:$0x3]
    %119 = vset.pattern.permute.xlu0 3
    %120 = vperm.xlu0 %119, %v43
    %v121 = vpop.permute.xlu0 %120
    %v124 = vlaneseq
    %v125 = vshrl.u32 %v124, 7
    %v126 = vsub.s32 0, %v125
    %v127 = vrot.slane %v118, %v126
    %v128 = vlaneseq
    %v129 = vshrl.u32 %v128, 7
    %v130 = vsub.s32 1, %v129
    %v131 = vrot.slane %v118, %v130
    %v134 = vmul.f32 %v121, %v127
    %v135 = vmul.f32 %v121, %v131
    %v136 = vadd.f32 %v94, %v134
    %v137 = vadd.f32 %v95, %v135
    %v138 = vadd.f32 %v115, %v136
    %v139 = vadd.f32 %v116, %v137
    %v140 = vpack.c.bf16 %v138, %v138
    %v141 = vpack.c.bf16 %v139, %v139
    %v142 = vld [vmem:[#allocation3] sm:$0xf]
    %v143 = vld [vmem:[#allocation3 + $0x4] sm:$0xf]
    %v144 = vld [vmem:[#allocation3 + $0x8] sm:$0xf]
    %v145 = vld [vmem:[#allocation3 + $0xc] sm:$0xf]
    %v146 = vld [vmem:[#allocation3 + $0x10] sm:$0xf]
    %v147 = vld [vmem:[#allocation3 + $0x14] sm:$0xf]
    %v148 = vld [vmem:[#allocation3 + $0x18] sm:$0xf]
    %v149 = vld [vmem:[#allocation3 + $0x1c] sm:$0xf]
    %v150 = vld [vmem:[#allocation3 + $0x20] sm:$0xf]
    %v151 = vld [vmem:[#allocation3 + $0x24] sm:$0xf]
    %v152 = vld [vmem:[#allocation3 + $0x28] sm:$0xf]
    %v153 = vld [vmem:[#allocation3 + $0x2c] sm:$0xf]
    %v154 = vld [vmem:[#allocation3 + $0x30] sm:$0xf]
    %v155 = vld [vmem:[#allocation3 + $0x34] sm:$0xf]
    %v156 = vld [vmem:[#allocation3 + $0x38] sm:$0xf]
    %v157 = vld [vmem:[#allocation3 + $0x3c] sm:$0xf]
    %v158 = vld [vmem:[#allocation3 + $0x40] sm:$0xf]
    %v159 = vld [vmem:[#allocation3 + $0x44] sm:$0xf]
    %v160 = vld [vmem:[#allocation3 + $0x48] sm:$0xf]
    %v161 = vld [vmem:[#allocation3 + $0x4c] sm:$0xf]
    %v162 = vld [vmem:[#allocation3 + $0x50] sm:$0xf]
    %v163 = vld [vmem:[#allocation3 + $0x54] sm:$0xf]
    %v164 = vld [vmem:[#allocation3 + $0x58] sm:$0xf]
    %v165 = vld [vmem:[#allocation3 + $0x5c] sm:$0xf]
    %v166 = vld [vmem:[#allocation3 + $0x60] sm:$0xf]
    %v167 = vld [vmem:[#allocation3 + $0x64] sm:$0xf]
    %v168 = vld [vmem:[#allocation3 + $0x68] sm:$0xf]
    %v169 = vld [vmem:[#allocation3 + $0x6c] sm:$0xf]
    %v170 = vld [vmem:[#allocation3 + $0x70] sm:$0xf]
    %v171 = vld [vmem:[#allocation3 + $0x74] sm:$0xf]
    %v172 = vld [vmem:[#allocation3 + $0x78] sm:$0xf]
    %v173 = vld [vmem:[#allocation3 + $0x7c] sm:$0xf]
    %v174 = vld [vmem:[%s4] sm:$0x1]
    %v176 = vlaneseq
    %v177 = vshrl.u32 %v176, 7
    %v178 = vsub.s32 0, %v177
    %v179 = vrot.slane %v174, %v178
    %v213 = vunpack.c.l.b16 %v142
    %v214 = vunpack.c.l.b16 %v143
    %v215 = vunpack.c.l.b16 %v144
    %v216 = vunpack.c.l.b16 %v145
    %v217 = vunpack.c.l.b16 %v146
    %v218 = vunpack.c.l.b16 %v147
    %v219 = vunpack.c.l.b16 %v148
    %v220 = vunpack.c.l.b16 %v149
    %v221 = vunpack.c.l.b16 %v150
    %v222 = vunpack.c.l.b16 %v151
    %v223 = vunpack.c.l.b16 %v152
    %v224 = vunpack.c.l.b16 %v153
    %v225 = vunpack.c.l.b16 %v154
    %v226 = vunpack.c.l.b16 %v155
    %v227 = vunpack.c.l.b16 %v156
    %v228 = vunpack.c.l.b16 %v157
    %v229 = vunpack.c.l.b16 %v158
    %v230 = vunpack.c.l.b16 %v159
    %v231 = vunpack.c.l.b16 %v160
    %v232 = vunpack.c.l.b16 %v161
    %v233 = vunpack.c.l.b16 %v162
    %v234 = vunpack.c.l.b16 %v163
    %v235 = vunpack.c.l.b16 %v164
    %v236 = vunpack.c.l.b16 %v165
    %v237 = vunpack.c.l.b16 %v166
    %v238 = vunpack.c.l.b16 %v167
    %v239 = vunpack.c.l.b16 %v168
    %v240 = vunpack.c.l.b16 %v169
    %v241 = vunpack.c.l.b16 %v170
    %v242 = vunpack.c.l.b16 %v171
    %v243 = vunpack.c.l.b16 %v172
    %v244 = vunpack.c.l.b16 %v173
    %v245 = vpack.c.b16 %v214, %v213
    %v246 = vpack.c.b16 %v216, %v215
    %v247 = vpack.c.b16 %v218, %v217
    %v248 = vpack.c.b16 %v220, %v219
    %v249 = vpack.c.b16 %v222, %v221
    %v250 = vpack.c.b16 %v224, %v223
    %v251 = vpack.c.b16 %v226, %v225
    %v252 = vpack.c.b16 %v228, %v227
    %v253 = vpack.c.b16 %v230, %v229
    %v254 = vpack.c.b16 %v232, %v231
    %v255 = vpack.c.b16 %v234, %v233
    %v256 = vpack.c.b16 %v236, %v235
    %v257 = vpack.c.b16 %v238, %v237
    %v258 = vpack.c.b16 %v240, %v239
    %v259 = vpack.c.b16 %v242, %v241
    %v260 = vpack.c.b16 %v244, %v243
    %277 = vmatprep.subr.bf16.mxu0 0
    %278 = vmatpush1.bf16.msra.mxu0 %v245
    %279 = vmatprep.subr.bf16.mxu0 0
    %280 = vmatpush1.bf16.msra.mxu0 %v246
    %281 = vmatprep.subr.bf16.mxu0 0
    %282 = vmatpush1.bf16.msra.mxu0 %v247
    %283 = vmatprep.subr.bf16.mxu0 0
    %284 = vmatpush1.bf16.msra.mxu0 %v248
    %285 = vmatprep.subr.bf16.mxu0 0
    %286 = vmatpush1.bf16.msra.mxu0 %v249
    %287 = vmatprep.subr.bf16.mxu0 0
    %288 = vmatpush1.bf16.msra.mxu0 %v250
    %289 = vmatprep.subr.bf16.mxu0 0
    %290 = vmatpush1.bf16.msra.mxu0 %v251
    %291 = vmatprep.subr.bf16.mxu0 0
    %292 = vmatpush1.bf16.msra.mxu0 %v252
    %293 = vmatprep.subr.bf16.mxu0 0
    %294 = vmatpush1.bf16.msra.mxu0 %v253
    %295 = vmatprep.subr.bf16.mxu0 0
    %296 = vmatpush1.bf16.msra.mxu0 %v254
    %297 = vmatprep.subr.bf16.mxu0 0
    %298 = vmatpush1.bf16.msra.mxu0 %v255
    %299 = vmatprep.subr.bf16.mxu0 0
    %300 = vmatpush1.bf16.msra.mxu0 %v256
    %301 = vmatprep.subr.bf16.mxu0 0
    %302 = vmatpush1.bf16.msra.mxu0 %v257
    %303 = vmatprep.subr.bf16.mxu0 0
    %304 = vmatpush1.bf16.msra.mxu0 %v258
    %305 = vmatprep.subr.bf16.mxu0 0
    %306 = vmatpush1.bf16.msra.mxu0 %v259
    %307 = vmatprep.subr.bf16.mxu0 0
    %308 = vmatpush1.bf16.msra.mxu0 %v260
    %309 = vmatprep.mubr.bf16.mxu0 %v141
    %310 = vmatmul.mubr.bf16.gmra.mrb[0].mxu0 %v140
    %v311 = vpop.f32.mrb[0].mxu0
    %v312 = vadd.f32 %v179, %v311
    %v313 = vpop.f32.mrb[0].mxu0
    %v314 = vpop.f32.mrb[0].mxu0
    %v315 = vpop.f32.mrb[0].mxu0
    %316 = vdwg.mxu0
    %v317 = vld [vmem:[%s5] sm:$0x1]
    %v319 = vlaneseq
    %v320 = vshrl.u32 %v319, 7
    %v321 = vsub.s32 0, %v320
    %v322 = vrot.slane %v317, %v321
    %v324 = vmul.f32 %v312, %v322
    %325 = vadd.xlane.f32.xlu0 %v324
    %v326 = vpop.xlane.xlu0 %325
    %v327 = vld [vmem:[#allocation2] sm:$0x1]
    %v329 = vlaneseq
    %v330 = vshrl.u32 %v329, 7
    %v331 = vsub.s32 0, %v330
    %v332 = vrot.slane %v327, %v331
    %v334 = vadd.f32 %v326, %v332
    %vm335 = vcmask 7168
    %336 = vst.msk [vmem:[%s7] sm:$0xff] %vm335, %v334
    // Predicated region
    $region34: #{tpu_custom_call.1} parent=1 // pred_check
      _
    $region35: #{tpu_custom_call.1} parent=1 // pred_check_branch
      %338 = sbr.rel (0) target = $region37
    $region36: #{tpu_custom_call.1} parent=1 // pred_region
      _
    $region37: #{tpu_custom_call.1} parent=1 // pred_fallthru
      _
    // Predicated region
    $region38: #{tpu_custom_call.1} parent=1 // pred_check
      _
    $region39: #{tpu_custom_call.1} parent=1 // pred_check_branch
      %340 = sbr.rel (0) target = $region41
    $region40: #{tpu_custom_call.1} parent=1 // pred_region
      _
    $region41: #{tpu_custom_call.1} parent=1 // pred_fallthru
      _
    %341 = vsyncpa [#allocation4], 1

</llo_original>
